<compile_context>
chip_gen: v5e
topology: v5e:2x2
jax: 0.10.0
libtpu: 0.0.40
codegen_flags: <defaults>
</compile_context>

<pallas_src>
import functools

import jax
import jax.numpy as jnp
from jax.experimental import pallas as pl
from jax.experimental.pallas import tpu as pltpu


# Explicit scoped-VMEM budget: generous headroom but still below v7x's 64 MiB
# physical VMEM.  With tm=256 and lm_emb_dim=4096 (bf16) the kernel uses well
# under this.
_VMEM_LIMIT_BYTES = 48 * 1024 * 1024


def _round_up(x, m):
    return ((x + m - 1) // m) * m


def _lora_single_kernel(x_ref, a_ref, b_ref, o_ref, *, scale):
    # y = scale * (x @ A) @ B, f32 accumulation on the MXU.
    xa = jnp.dot(x_ref[...], a_ref[...], preferred_element_type=jnp.float32)
    xa = (xa * scale).astype(b_ref.dtype)      # scale on the [tm, rank] tensor
    out = jnp.dot(xa, b_ref[...], preferred_element_type=jnp.float32)
    o_ref[...] = out.astype(o_ref.dtype)


def _lora_fused_kernel(x_ref, a_ref, b_ref, o_ref, y_sc, *, scale):
    # Grid: (token_tiles, n_layers), layer axis innermost ("arbitrary").
    # The activation tile lives in y_sc (f32 VMEM) across the layer axis; HBM
    # is touched only once for x and once for the final output.
    l = pl.program_id(1)

    @pl.when(l == 0)
    def _():
        y_sc[...] = x_ref[...].astype(jnp.float32)

    y_in = y_sc[...].astype(a_ref.dtype)
    xa = jnp.dot(y_in, a_ref[...], preferred_element_type=jnp.float32)
    xa = (xa * scale).astype(b_ref.dtype)      # scale on the [tm, rank] tensor
    y_sc[...] = jnp.dot(xa, b_ref[...], preferred_element_type=jnp.float32)

    @pl.when(l == pl.num_programs(1) - 1)
    def _():
        o_ref[...] = y_sc[...].astype(o_ref.dtype)


def _lora_single_call(x, A, B, *, scale, tm):
    N, in_dim = x.shape
    rank = A.shape[1]
    out_dim = B.shape[1]
    kernel = functools.partial(_lora_single_kernel, scale=scale)
    return pl.pallas_call(
        kernel,
        out_shape=jax.ShapeDtypeStruct((N, out_dim), x.dtype),
        grid_spec=pltpu.PrefetchScalarGridSpec(
            num_scalar_prefetch=0,
            grid=(N // tm,),
            in_specs=[
                pl.BlockSpec((tm, in_dim), lambda i: (i, 0)),       # x tile
                pl.BlockSpec((in_dim, rank), lambda i: (0, 0)),     # A (resident)
                pl.BlockSpec((rank, out_dim), lambda i: (0, 0)),    # B (resident)
            ],
            out_specs=pl.BlockSpec((tm, out_dim), lambda i: (i, 0)),
        ),
        compiler_params=pltpu.CompilerParams(
            dimension_semantics=("parallel",),
            vmem_limit_bytes=_VMEM_LIMIT_BYTES,
        ),
    )(x, A, B)


def _lora_stack_call(x, A_stack, B_stack, *, scale, tm):
    N, in_dim = x.shape
    L, in_dim_a, rank = A_stack.shape
    out_dim = B_stack.shape[2]
    assert in_dim == in_dim_a == out_dim, "fused stack requires square layers"
    kernel = functools.partial(_lora_fused_kernel, scale=scale)
    return pl.pallas_call(
        kernel,
        out_shape=jax.ShapeDtypeStruct((N, out_dim), x.dtype),
        grid_spec=pltpu.PrefetchScalarGridSpec(
            num_scalar_prefetch=0,
            grid=(N // tm, L),
            in_specs=[
                pl.BlockSpec((tm, in_dim), lambda i, l: (i, 0)),            # x tile
                pl.BlockSpec((None, in_dim, rank), lambda i, l: (l, 0, 0)),  # A[l]
                pl.BlockSpec((None, rank, out_dim), lambda i, l: (l, 0, 0)),  # B[l]
            ],
            out_specs=pl.BlockSpec((tm, out_dim), lambda i, l: (i, 0)),
            scratch_shapes=[pltpu.VMEM((tm, out_dim), jnp.float32)],
        ),
        compiler_params=pltpu.CompilerParams(
            dimension_semantics=("parallel", "arbitrary"),
            vmem_limit_bytes=_VMEM_LIMIT_BYTES,
        ),
    )(x, A_stack, B_stack)


def lora_adapters_apply(x, params, *, alpha, rank, tm=256):
    """Sequentially apply the LoRALayer stack (LoraAdapters.loras).

    x: [N_tokens, mm_emb_dim]; params: list of (A, B) with
    A0: [mm_emb_dim, rank], B0: [rank, lm_emb_dim], A_i/B_i: lm->lm.
    Returns [N_tokens, lm_emb_dim].  tm=256 suits v6e/v7x; pass tm=128 on v5e.
    """
    N, in_dim = x.shape
    scale = float(alpha) / float(rank)
    lm_dim = params[0][1].shape[1]

    # Tile the token axis; pad N instead of asserting divisibility.
    tm_eff = min(tm, _round_up(N, 8))
    n_pad = _round_up(N, tm_eff)
    y = x if n_pad == N else jnp.pad(x, ((0, n_pad - N), (0, 0)))

    idx = 0
    if in_dim != lm_dim:
        # Layer 0 changes the feature width -> run it as its own call.
        A0, B0 = params[0]
        y = _lora_single_call(y, A0, B0, scale=scale, tm=tm_eff)
        idx = 1

    rest = params[idx:]
    if rest:
        # Fuse all remaining (lm -> lm) layers into one kernel.
        A_stack = jnp.stack([A for A, _ in rest], axis=0)
        B_stack = jnp.stack([B for _, B in rest], axis=0)
        y = _lora_stack_call(y, A_stack, B_stack, scale=scale, tm=tm_eff)

    return y if n_pad == N else y[:N]


def make_lora_params(key, *, n_proj_layers, mm_emb_dim, lm_emb_dim, rank,
                     dtype=jnp.bfloat16):
    """Synthetic init following LoRALayer.__init__ shapes (bf16 storage).

    PyTorch init: A ~ N(0,1)/sqrt(rank) [in_dim, rank], B = zeros [rank, out].
    B is given small random values (instead of zeros) so the test output is
    non-trivial; shapes match LoRALayer exactly.
    """
    params = []
    std = 1.0 / float(rank) ** 0.5
    for layer_idx in range(n_proj_layers):
        in_dim = mm_emb_dim if layer_idx == 0 else lm_emb_dim
        key, ka, kb = jax.random.split(key, 3)
        A = (jax.random.normal(ka, (in_dim, rank), dtype=jnp.float32) * std).astype(dtype)
        B = (jax.random.normal(kb, (rank, lm_emb_dim), dtype=jnp.float32) * 0.02).astype(dtype)
        params.append((A, B))
    return params


def reference_forward(x, params, *, alpha, rank):
    """Pure-JAX reference mirroring the kernel's precision (bf16 in, f32 acc)."""
    scale = alpha / rank
    cdt = params[0][0].dtype
    y = x.astype(jnp.float32)
    for (A, B) in params:
        xa = jnp.dot(y.astype(cdt), A, preferred_element_type=jnp.float32) * scale
        y = jnp.dot(xa.astype(cdt), B, preferred_element_type=jnp.float32)
    return y.astype(x.dtype)


if __name__ == "__main__":
    # Small synthetic config; N=14 tokens exercises the pad-to-tile path,
    # mm_emb_dim != lm_emb_dim exercises the split (single + fused-stack) path.
    batch, seq = 2, 7
    mm_emb_dim, lm_emb_dim = 32, 64
    rank, alpha = 8, 16
    n_proj_layers = 3

    key = jax.random.PRNGKey(0)
    kx, kp = jax.random.split(key)

    # layout: [tokens, features] = [batch*seq, mm_emb_dim], bf16 activations.
    x = jax.random.normal(
        kx, (batch * seq, mm_emb_dim), dtype=jnp.float32
    ).astype(jnp.bfloat16)
    params = make_lora_params(
        kp,
        n_proj_layers=n_proj_layers,
        mm_emb_dim=mm_emb_dim,
        lm_emb_dim=lm_emb_dim,
        rank=rank,
    )

    out = lora_adapters_apply(x, params, alpha=alpha, rank=rank)
    out = jax.block_until_ready(out)

    ref = reference_forward(x, params, alpha=alpha, rank=rank)
    assert out.shape == (batch * seq, lm_emb_dim)
    assert jnp.allclose(
        out.astype(jnp.float32), ref.astype(jnp.float32), atol=2e-3, rtol=2e-2
    ), "mismatch vs reference"

    print("KERNEL_OK")
</pallas_src>

<mosaic_0001>
module attributes {stable_mosaic.version = 11 : i64} {
  func.func @_lora_single_kernel(%arg0: i32, %arg1: memref<16x32xbf16, #tpu.memory_space<vmem>>, %arg2: memref<32x8xbf16, #tpu.memory_space<vmem>>, %arg3: memref<8x64xbf16, #tpu.memory_space<vmem>>, %arg4: memref<16x64xbf16, #tpu.memory_space<vmem>>) attributes {dimension_semantics = [#tpu.dimension_semantics<parallel>], iteration_bounds = array<i64: 1>, scalar_prefetch = 0 : i64, scratch_operands = 0 : i64, tpu.core_type = #tpu.core_type<tc>, window_params = [{transform_indices = @transform_0, window_bounds = array<i64: 16, 32>}, {pipeline_mode = #tpu.pipeline_mode<synchronous>, transform_indices = @transform_1, window_bounds = array<i64: 32, 8>}, {pipeline_mode = #tpu.pipeline_mode<synchronous>, transform_indices = @transform_2, window_bounds = array<i64: 8, 64>}, {transform_indices = @transform_3, window_bounds = array<i64: 16, 64>}]} {
    %c0 = arith.constant 0 : index
    %c0_0 = arith.constant 0 : index
    %0 = vector.load %arg1[%c0, %c0_0] : memref<16x32xbf16, #tpu.memory_space<vmem>>, vector<16x32xbf16>
    %c0_1 = arith.constant 0 : index
    %c0_2 = arith.constant 0 : index
    %1 = vector.load %arg2[%c0_1, %c0_2] : memref<32x8xbf16, #tpu.memory_space<vmem>>, vector<32x8xbf16>
    %cst = arith.constant dense<0.000000e+00> : vector<16x8xf32>
    %2 = tpu.matmul %0, %1, %cst {dimension_numbers = #tpu.dot_dimension_numbers<[1], [0], [0], [1], [0, 0, 1, 1], [], []>} : vector<16x32xbf16>, vector<32x8xbf16>, vector<16x8xf32> -> vector<16x8xf32>
    %cst_3 = arith.constant 2.000000e+00 : f32
    %3 = vector.broadcast %cst_3 : f32 to vector<16x8xf32>
    %4 = arith.mulf %2, %3 : vector<16x8xf32>
    %5 = arith.truncf %4 : vector<16x8xf32> to vector<16x8xbf16>
    %c0_4 = arith.constant 0 : index
    %c0_5 = arith.constant 0 : index
    %6 = vector.load %arg3[%c0_4, %c0_5] : memref<8x64xbf16, #tpu.memory_space<vmem>>, vector<8x64xbf16>
    %cst_6 = arith.constant dense<0.000000e+00> : vector<16x64xf32>
    %7 = tpu.matmul %5, %6, %cst_6 {dimension_numbers = #tpu.dot_dimension_numbers<[1], [0], [0], [1], [0, 0, 1, 1], [], []>} : vector<16x8xbf16>, vector<8x64xbf16>, vector<16x64xf32> -> vector<16x64xf32>
    %8 = arith.truncf %7 : vector<16x64xf32> to vector<16x64xbf16>
    %c0_7 = arith.constant 0 : index
    %c0_8 = arith.constant 0 : index
    %9 = vector.load %arg4[%c0_7, %c0_8] : memref<16x64xbf16, #tpu.memory_space<vmem>>, vector<16x64xbf16>
    tpu.vector_store %arg4[%c0_7, %c0_8], %8 {strides = array<i32>} : memref<16x64xbf16, #tpu.memory_space<vmem>>, vector<16x64xbf16>,
    return
  }
  func.func @transform_0(%arg0: i32) -> (i32, i32) {
    %c0_i32 = arith.constant 0 : i32
    %c0_i32_0 = arith.constant 0 : i32
    return %arg0, %c0_i32 : i32, i32
  }
  func.func @transform_1(%arg0: i32) -> (i32, i32) {
    %c0_i32 = arith.constant 0 : i32
    %c0_i32_0 = arith.constant 0 : i32
    %c0_i32_1 = arith.constant 0 : i32
    return %c0_i32, %c0_i32_0 : i32, i32
  }
  func.func @transform_2(%arg0: i32) -> (i32, i32) {
    %c0_i32 = arith.constant 0 : i32
    %c0_i32_0 = arith.constant 0 : i32
    %c0_i32_1 = arith.constant 0 : i32
    return %c0_i32, %c0_i32_0 : i32, i32
  }
  func.func @transform_3(%arg0: i32) -> (i32, i32) {
    %c0_i32 = arith.constant 0 : i32
    %c0_i32_0 = arith.constant 0 : i32
    return %arg0, %c0_i32 : i32, i32
  }
}

</mosaic_0001>

<llo_original>
// kernel: tpu_custom_call.1
$region0: #{tpu_custom_call.1}
  #allocation0 [shape = 'u32[]', space=smem, size = 0x4, offset = 0x4, fixed_abs, tag = 'smem constant byte address 0x4 - core index']
  #allocation1 [shape = 'u32[72,128]{1,0:T(1,128)}', space=vmem, size = 0x9000, scoped, tag = 'internal scratch']
  %s0 = inlined_call_operand.vmem [shape: bf16[16,32], index: 0, kind: input, shape index: {}]
  %s1 = inlined_call_operand.vmem [shape: bf16[32,8], index: 1, kind: input, shape index: {}]
  %s2 = inlined_call_operand.vmem [shape: bf16[8,64], index: 2, kind: input, shape index: {}]
  %s3 = inlined_call_operand.hbm [shape: bf16[16,64], index: 3, kind: output, shape index: {}]
  %s4 = sld [smem:[#allocation0]]
  $region22: #{tpu_custom_call.1} parent=0
    _
  %s6 = ssub.s32 1, %s4
  %s7 = scalar_select 0, %s6, %s4
  $region1: #{tpu_custom_call.1} parent=0
    #allocation2 [shape = 'u8[4096]{0}', space=vmem, size = 0x1000, scoped, tag = 'output window, operand 0, single buffered']
    #allocation3 [shape = 's32[1]{0}', space=sflag, size = 0x4, scoped, tag = 'scoped memory for tpu_custom_call.1']
    %8 = vsyncpa [#allocation3], 0
    // Predicated region
    $region2: #{tpu_custom_call.1} parent=1 // pred_check
      _
    $region3: #{tpu_custom_call.1} parent=1 // pred_check_branch
      %10 = sbr.rel (0) target = $region5
    $region4: #{tpu_custom_call.1} parent=1 // pred_region
      _
    $region5: #{tpu_custom_call.1} parent=1 // pred_fallthru
      _
    // Predicated region
    $region6: #{tpu_custom_call.1} parent=1 // pred_check
      _
    $region7: #{tpu_custom_call.1} parent=1 // pred_check_branch
      %12 = sbr.rel (0) target = $region9
    $region8: #{tpu_custom_call.1} parent=1 // pred_region
      _
    $region9: #{tpu_custom_call.1} parent=1 // pred_fallthru
      _
    // Predicated region
    $region10: #{tpu_custom_call.1} parent=1 // pred_check
      _
    $region11: #{tpu_custom_call.1} parent=1 // pred_check_branch
      %14 = sbr.rel (0) target = $region13
    $region12: #{tpu_custom_call.1} parent=1 // pred_region
      _
    $region13: #{tpu_custom_call.1} parent=1 // pred_fallthru
      _
    %v16 = vld [vmem:[%s0] sm:$0xf]
    %v17 = vld [vmem:[%s0 + $0x4] sm:$0xf]
    %v18 = vld [vmem:[%s1] sm:$0xf]
    %v19 = vld [vmem:[%s1 + $0x4] sm:$0xf]
    %v20 = vld [vmem:[%s1 + $0x8] sm:$0xf]
    %v21 = vld [vmem:[%s1 + $0xc] sm:$0xf]
    %v24 = vunpack.c.l.b16 %v16
    %v25 = vunpack.c.l.b16 %v17
    %v26 = vpack.c.b16 %v25, %v24
    %v31 = vunpack.c.l.b16 %v18
    %v32 = vunpack.c.l.b16 %v19
    %v33 = vunpack.c.l.b16 %v20
    %v34 = vunpack.c.l.b16 %v21
    %v35 = vpack.c.b16 %v32, %v31
    %v36 = vpack.c.b16 %v34, %v33
    %vm39 = vcmask 261120
    %v41 = vsel %vm39, %v26, 0
    %43 = vmatpush.bf16.msra.mxu0 0
    %44 = vmatpush.bf16.msra.mxu0 0
    %45 = vmatpush.bf16.msra.mxu0 0
    %46 = vmatpush.bf16.msra.mxu0 0
    %47 = vmatpush.bf16.msra.mxu0 0
    %48 = vmatpush.bf16.msra.mxu0 0
    %49 = vmatpush.bf16.msra.mxu0 %v36
    %50 = vmatpush.bf16.msra.mxu0 %v35
    %51 = vmatmul.bf16.gmra.mxu0 %v41
    %v52 = vpop.f32.mrf.mxu0
    %v53 = vadd.f32 0.0, %v52
    %v54 = vpop.f32.mrf.mxu0
    %v55 = vadd.f32 0.0, %v54
    %56 = vdwg.mxu0
    %v57 = vmul.f32 %v53, 2.0
    %v58 = vmul.f32 %v55, 2.0
    %v59 = vpack.c.bf16 %v58, %v57
    %v60 = vld [vmem:[%s2] sm:$0xf]
    %vm61 = vcmask 64512
    %v63 = vsel %vm61, %v59, 0
    %vm65 = vcmask 1043456
    %v67 = vsel %vm65, %v60, 0
    %69 = vmatpush.bf16.msra.mxu0 0
    %70 = vmatpush.bf16.msra.mxu0 0
    %71 = vmatpush.bf16.msra.mxu0 0
    %72 = vmatpush.bf16.msra.mxu0 0
    %73 = vmatpush.bf16.msra.mxu0 0
    %74 = vmatpush.bf16.msra.mxu0 0
    %75 = vmatpush.bf16.msra.mxu0 0
    %76 = vmatpush.bf16.msra.mxu0 %v67
    %77 = vmatmul.bf16.gmra.mxu0 %v63
    %v78 = vpop.f32.mrf.mxu0
    %v79 = vadd.f32 0.0, %v78
    %v80 = vpop.f32.mrf.mxu0
    %v81 = vadd.f32 0.0, %v80
    %82 = vdwg.mxu0
    %v83 = vpack.c.bf16 %v79, %v79
    %v84 = vpack.c.bf16 %v81, %v81
    %vm85 = vcmask 519168
    %86 = vst.msk [vmem:[#allocation2] sm:$0xf] %vm85, %v83
    %87 = vst.msk [vmem:[#allocation2 + $0x4] sm:$0xf] %vm85, %v84
    // Predicated region
    $region14: #{tpu_custom_call.1} parent=1 // pred_check
      _
    $region15: #{tpu_custom_call.1} parent=1 // pred_check_branch
      %89 = sbr.rel (0) target = $region17
    $region16: #{tpu_custom_call.1} parent=1 // pred_region
      %91 = vsyncadd [#allocation3], 0
      %s92 = sshll.u32 [#allocation2], 4
      %s93 = int_to_ptr.vmem [resolvable:$true] %s92
      %s94 = sshll.u32 %s3, 4
      %s95 = int_to_ptr.hbm [resolvable:$true] %s94
      %100 = dma.vmem_to_hbm [thread:$0]  %s93, 128, %s95, [#allocation3], 64, 64, 4
    $region17: #{tpu_custom_call.1} parent=1 // pred_fallthru
      _
    // Predicated region
    $region18: #{tpu_custom_call.1} parent=1 // pred_check
      _
    $region19: #{tpu_custom_call.1} parent=1 // pred_check_branch
      %102 = sbr.rel (0) target = $region21
    $region20: #{tpu_custom_call.1} parent=1 // pred_region
      %104 = dma.done [#allocation3], 128
    $region21: #{tpu_custom_call.1} parent=1 // pred_fallthru
      _
    %105 = vsyncpa [#allocation3], 1

</llo_original>
